<compile_context>
chip_gen: v5e
topology: v5e:2x2
jax: 0.10.0
libtpu: 0.0.40
codegen_flags: <defaults>
</compile_context>

<pallas_src>
import jax
import jax.numpy as jnp
from jax.experimental import pallas as pl
from jax.experimental.pallas import tpu as pltpu


def _bf16_roundtrip_kernel(x_ref, o_ref):
    # Elementwise hot path: fp32 -> bf16 (RNE) -> fp32 on the VPU.
    o_ref[...] = x_ref[...].astype(jnp.bfloat16).astype(jnp.float32)


def _device_kind() -> str:
    try:
        return jax.devices()[0].device_kind.lower()
    except Exception:
        return ""


def _default_block_bytes() -> int:
    """Per-generation block size (one constant can't fit v5e and v7x).

    v6e/v7x: 4 MiB blocks -> 4 double-buffered (in+out) blocks = 16 MiB, under
    the 32 MiB default scoped VMEM, and large enough to amortize the ~0.35 us
    per-step pipeline overhead against fast HBM. v5e / older / unknown chips:
    2 MiB -> 8 MiB, safely under the 16 MiB default scoped VMEM.
    """
    kind = _device_kind()
    if ("v6" in kind) or ("v7" in kind) or ("7x" in kind):
        return 4 << 20
    return 2 << 20


def _grid_semantics():
    """CORE_PARALLEL on v7x so the stream splits across both TensorCores."""
    kind = _device_kind()
    if ("v7" in kind) or ("7x" in kind):
        return (pltpu.CORE_PARALLEL,)
    return ("parallel",)


def _grid_pallas_call(x, out_shape, grid, in_spec, out_spec, cost, in_place):
    def call(dim_sem):
        return pl.pallas_call(
            _bf16_roundtrip_kernel,
            out_shape=out_shape,
            grid=grid,
            in_specs=[in_spec],
            out_specs=out_spec,
            compiler_params=pltpu.CompilerParams(dimension_semantics=dim_sem),
            cost_estimate=cost,
            input_output_aliases=({0: 0} if in_place else {}),
        )(x)

    dim_sem = _grid_semantics()
    if dim_sem == ("parallel",):
        return call(dim_sem)
    try:
        return call(dim_sem)
    except Exception:
        # CORE_PARALLEL only lowers on multi-TensorCore chips / recent Mosaic;
        # fall back to the portable semantics rather than failing.
        return call(("parallel",))


def _quantize_2d(x2d: jax.Array, block_bytes: int, in_place: bool) -> jax.Array:
    """bf16 round-trip on a lane-dense (rows, w) f32 slab (w % 128 == 0)."""
    rows, w = x2d.shape
    total_bytes = rows * w * 4
    cost = pl.CostEstimate(flops=0, transcendentals=0,
                           bytes_accessed=2 * total_bytes)
    out_shape = jax.ShapeDtypeStruct((rows, w), jnp.float32)

    # Small inputs: one full-array block, no grid / pipeline overhead.
    if total_bytes <= block_bytes:
        return pl.pallas_call(
            _bf16_roundtrip_kernel,
            out_shape=out_shape,
            cost_estimate=cost,
            input_output_aliases=({0: 0} if in_place else {}),
        )(x2d)

    # Streaming path: ~block_bytes tiles; ragged last block handled by cdiv
    # (Pallas masks the out-of-bounds writes of the partial block; safe since
    # the op is purely elementwise).
    tr = max(8, (block_bytes // (4 * w)) // 8 * 8)   # rows/block, mult of 8
    grid = (pl.cdiv(rows, tr),)
    spec = pl.BlockSpec((tr, w), lambda i: (i, 0))
    return _grid_pallas_call(x2d, out_shape, grid, spec, spec, cost, in_place)


def _quantize_1d(x1d: jax.Array, block_bytes: int, in_place: bool) -> jax.Array:
    """bf16 round-trip on a flat f32 buffer of arbitrary (ragged) length.

    Sizes not divisible by 128 are handled entirely inside Pallas with a
    cdiv-masked last block: no padding copy and no concatenate pass.
    """
    n = x1d.shape[0]
    total_bytes = n * 4
    cost = pl.CostEstimate(flops=0, transcendentals=0,
                           bytes_accessed=2 * total_bytes)
    out_shape = jax.ShapeDtypeStruct((n,), jnp.float32)

    # Small inputs: one full-array block (block == array, no 128 constraint).
    if total_bytes <= block_bytes:
        return pl.pallas_call(
            _bf16_roundtrip_kernel,
            out_shape=out_shape,
            cost_estimate=cost,
            input_output_aliases=({0: 0} if in_place else {}),
        )(x1d)

    blk = max(1024, (block_bytes // 4) // 1024 * 1024)   # elems, mult of 1024
    blk = min(blk, pl.cdiv(n, 1024) * 1024)              # don't over-allocate
    grid = (pl.cdiv(n, blk),)
    spec = pl.BlockSpec((blk,), lambda i: (i,))
    try:
        return _grid_pallas_call(x1d, out_shape, grid, spec, spec, cost,
                                 in_place)
    except Exception:
        # TODO(synk): if this Mosaic build rejects rank-1 blocked windows,
        # fall back to the identical single-pass XLA cast for ragged sizes.
        return x1d.astype(jnp.bfloat16).astype(jnp.float32)


def bfloat16_quantize(x: jax.Array, *, block_bytes: int | None = None,
                      in_place: bool = False) -> jax.Array:
    """Round-trip-cast x (float32) through bfloat16, elementwise.

    block_bytes: override the per-generation VMEM tile size (default picks
        2 MiB on v5e-class chips, 4 MiB on v6e/v7x).
    in_place: add input_output_aliases={0: 0}; only a win when the caller
        donates x (e.g. x is an intermediate inside jit), otherwise XLA
        inserts a defensive copy -- hence off by default.
    """
    assert x.dtype == jnp.float32
    orig_shape = x.shape
    n = x.size
    if n == 0:
        return x
    if block_bytes is None:
        block_bytes = _default_block_bytes()

    x_flat = x.reshape(-1)   # contiguous reshape: no copy

    if n % 128 == 0:
        # Lane-dense 2-D slab; 512-wide when possible (fewer, longer rows),
        # 128-wide otherwise (still unmasked 128-lane stores).
        w = 512 if n % 512 == 0 else 128
        out = _quantize_2d(x_flat.reshape(n // w, w), block_bytes, in_place)
    else:
        # Ragged size: stream the flat buffer with a cdiv-masked last block.
        out = _quantize_1d(x_flat, block_bytes, in_place)
    return out.reshape(orig_shape)


if __name__ == "__main__":
    def ref(a):
        return a.astype(jnp.bfloat16).astype(jnp.float32)

    # NCHW input, small shape consistent with a conv-style activation
    # (single-block fast path).
    x = jax.random.normal(jax.random.PRNGKey(0), (2, 4, 16, 16),
                          dtype=jnp.float32) * 3.14159
    y = bfloat16_quantize(x)
    jax.block_until_ready(y)
    assert y.shape == x.shape and y.dtype == jnp.float32
    assert jnp.array_equal(y, ref(x)), "mismatch vs bf16 round-trip reference"

    # Tiled (grid) path, evenly divisible blocks.
    x2 = jax.random.normal(jax.random.PRNGKey(1), (64, 1024), dtype=jnp.float32)
    y2 = bfloat16_quantize(x2, block_bytes=8192)
    jax.block_until_ready(y2)
    assert jnp.array_equal(y2, ref(x2))

    # Tiled (grid) path with a masked partial last block (90 rows of 512).
    x3 = jax.random.normal(jax.random.PRNGKey(2), (90, 512), dtype=jnp.float32)
    y3 = bfloat16_quantize(x3, block_bytes=8192)
    jax.block_until_ready(y3)
    assert jnp.array_equal(y3, ref(x3))

    # Ragged size (not a multiple of 128): single-block 1-D path ...
    x4 = jax.random.normal(jax.random.PRNGKey(3), (33, 130), dtype=jnp.float32)
    y4 = bfloat16_quantize(x4)
    jax.block_until_ready(y4)
    assert jnp.array_equal(y4, ref(x4))

    # ... and the multi-block 1-D stream with a cdiv-masked last block
    # (replaces the old concat-based ragged tail).
    y5 = bfloat16_quantize(x4, block_bytes=8192)
    jax.block_until_ready(y5)
    assert jnp.array_equal(y5, ref(x4))

    print("KERNEL_OK")
</pallas_src>

<mosaic_0001>
module attributes {stable_mosaic.version = 11 : i64} {
  func.func @_bf16_roundtrip_kernel(%arg0: memref<4x512xf32, #tpu.memory_space<vmem>>, %arg1: memref<4x512xf32, #tpu.memory_space<vmem>>) attributes {dimension_semantics = [], scalar_prefetch = 0 : i64, scratch_operands = 0 : i64, tpu.core_type = #tpu.core_type<tc>} {
    %c0 = arith.constant 0 : index
    %c0_0 = arith.constant 0 : index
    %0 = vector.load %arg0[%c0, %c0_0] : memref<4x512xf32, #tpu.memory_space<vmem>>, vector<4x512xf32>
    %1 = arith.truncf %0 : vector<4x512xf32> to vector<4x512xbf16>
    %2 = arith.extf %1 : vector<4x512xbf16> to vector<4x512xf32>
    %c0_1 = arith.constant 0 : index
    %c0_2 = arith.constant 0 : index
    %3 = vector.load %arg1[%c0_1, %c0_2] : memref<4x512xf32, #tpu.memory_space<vmem>>, vector<4x512xf32>
    tpu.vector_store %arg1[%c0_1, %c0_2], %2 {strides = array<i32>} : memref<4x512xf32, #tpu.memory_space<vmem>>, vector<4x512xf32>,
    return
  }
}

</mosaic_0001>

<llo_original>
// kernel: tpu_custom_call.1
$region0: #{tpu_custom_call.1}
  #allocation0 [shape = 'u32[]', space=smem, size = 0x4, offset = 0x4, fixed_abs, tag = 'smem constant byte address 0x4 - core index']
  #allocation1 [shape = 'u32[72,128]{1,0:T(1,128)}', space=vmem, size = 0x9000, scoped, tag = 'internal scratch']
  %s0 = inlined_call_operand.hbm [shape: f32[4,512], index: 0, kind: input, shape index: {}]
  %s1 = inlined_call_operand.hbm [shape: f32[4,512], index: 1, kind: output, shape index: {}]
  %s2 = sld [smem:[#allocation0]]
  $region18: #{tpu_custom_call.1} parent=0
    _
  %s4 = ssub.s32 1, %s2
  %s5 = scalar_select 0, %s4, %s2
  $region1: #{tpu_custom_call.1} parent=0
    #allocation2 [shape = 'u8[8192]{0}', space=vmem, size = 0x2000, scoped, tag = 'input window, operand 0, single buffered']
    #allocation3 [shape = 's32[1]{0}', space=sflag, size = 0x4, scoped, tag = 'scoped memory for tpu_custom_call.1']
    #allocation4 [shape = 's32[1]{0}', space=sflag, size = 0x4, scoped, tag = 'scoped memory for tpu_custom_call.1']
    #allocation5 [shape = 'u8[8192]{0}', space=vmem, size = 0x2000, scoped, tag = 'output window, operand 0, single buffered']
    %6 = vsyncpa [#allocation3], 0
    %7 = vsyncpa [#allocation4], 0
    // Predicated region
    $region2: #{tpu_custom_call.1} parent=1 // pred_check
      _
    $region3: #{tpu_custom_call.1} parent=1 // pred_check_branch
      %9 = sbr.rel (0) target = $region5
    $region4: #{tpu_custom_call.1} parent=1 // pred_region
      %11 = vsyncadd [#allocation3], 0
      %s13 = sshll.u32 %s0, 4
      %s14 = int_to_ptr.hbm [resolvable:$true] %s13
      %s15 = sshll.u32 [#allocation2], 4
      %s16 = int_to_ptr.vmem [resolvable:$true] %s15
      %18 = dma.hbm_to_vmem [thread:$0]  %s14, 256, %s16, [#allocation3]
    $region5: #{tpu_custom_call.1} parent=1 // pred_fallthru
      _
    // Predicated region
    $region6: #{tpu_custom_call.1} parent=1 // pred_check
      _
    $region7: #{tpu_custom_call.1} parent=1 // pred_check_branch
      %20 = sbr.rel (0) target = $region9
    $region8: #{tpu_custom_call.1} parent=1 // pred_region
      %22 = dma.done [#allocation3], 256
    $region9: #{tpu_custom_call.1} parent=1 // pred_fallthru
      _
    %v23 = vld [vmem:[#allocation2] sm:$0xff]
    %v24 = vld [vmem:[#allocation2 + $0x8] sm:$0xff]
    %27 = vst [vmem:[#allocation1] ss:$2 sm:$0xff] %v23
    %s28 = scalar_lea.vmem [#allocation1], 16
    %29 = vst [vmem:[%s28] ss:$2 sm:$0xff] %v24
    %v30 = vld.sshfl [vmem:[#allocation1] sm:$0xff pattern:$0x75316420]
    %v31 = vld.sshfl [vmem:[#allocation1 + $0x8] sm:$0xff pattern:$0x75316420]
    %v32 = vld.sshfl [vmem:[#allocation1 + $0x10] sm:$0xff pattern:$0x75316420]
    %v33 = vld.sshfl [vmem:[#allocation1 + $0x18] sm:$0xff pattern:$0x75316420]
    %v38 = vpack.c.bf16 %v31, %v30
    %v39 = vpack.c.bf16 %v33, %v32
    %v40 = vunpack.c.l.bf16 %v38
    %v41 = vunpack.c.h.bf16 %v38
    %v42 = vunpack.c.l.bf16 %v39
    %v43 = vunpack.c.h.bf16 %v39
    %v48 = vrot.slane %v41, 4
    %v49 = vrot.slane %v43, 4
    %vm50 = vcmask 1043456
    %v51 = vsel %vm50, %v40, %v48
    %v52 = vsel %vm50, %v42, %v49
    %55 = vst [vmem:[#allocation5] sm:$0xff] %v51
    %56 = vst [vmem:[#allocation5 + $0x8] sm:$0xff] %v52
    // Predicated region
    $region10: #{tpu_custom_call.1} parent=1 // pred_check
      _
    $region11: #{tpu_custom_call.1} parent=1 // pred_check_branch
      %58 = sbr.rel (0) target = $region13
    $region12: #{tpu_custom_call.1} parent=1 // pred_region
      %60 = vsyncadd [#allocation4], 0
      %s62 = sshll.u32 [#allocation5], 4
      %s63 = int_to_ptr.vmem [resolvable:$true] %s62
      %s64 = sshll.u32 %s1, 4
      %s65 = int_to_ptr.hbm [resolvable:$true] %s64
      %67 = dma.vmem_to_hbm [thread:$0]  %s63, 256, %s65, [#allocation4]
    $region13: #{tpu_custom_call.1} parent=1 // pred_fallthru
      _
    // Predicated region
    $region14: #{tpu_custom_call.1} parent=1 // pred_check
      _
    $region15: #{tpu_custom_call.1} parent=1 // pred_check_branch
      %69 = sbr.rel (0) target = $region17
    $region16: #{tpu_custom_call.1} parent=1 // pred_region
      %71 = dma.done [#allocation4], 256
    $region17: #{tpu_custom_call.1} parent=1 // pred_fallthru
      _
    %72 = vsyncpa [#allocation3], 1
    %73 = vsyncpa [#allocation4], 1

</llo_original>
